<compile_context>
chip_gen: v7x
topology: tpu7x:2x2x1
jax: 0.10.0
libtpu: 0.0.40
codegen_flags: <defaults>
</compile_context>

<pallas_src>
import functools

import jax
import jax.numpy as jnp
from jax.experimental import pallas as pl
from jax.experimental.pallas import tpu as pltpu

HIDDEN_DIM2 = 150   # input features
HIDDEN_DIM3 = 200   # hidden features
OUTPUT_DIM = 300    # output features


def _round_up(n: int, m: int) -> int:
    return ((n + m - 1) // m) * m


def _mlp_kernel(x_ref, w1_ref, b1_ref, w2_ref, b2_ref, o_ref):
    # x_ref : (TB, 150) f32/bf16   w1_ref: (150, 200) bf16   b1_ref: (1, 200) f32
    # w2_ref: (200, 300) bf16      b2_ref: (1, 300)  f32     o_ref : (TB, 300) f32
    x = x_ref[...].astype(jnp.bfloat16)

    # Linear 1: bf16 MXU operands, f32 accumulation; bias + ReLU in f32
    # (v5e-safe: no bf16 VPU work).
    h = jnp.dot(x, w1_ref[...], preferred_element_type=jnp.float32)
    h = jnp.maximum(h + b1_ref[...], 0.0)

    # Linear 2: bf16 MXU operands, f32 accumulation, f32 output.
    out = jnp.dot(h.astype(jnp.bfloat16), w2_ref[...],
                  preferred_element_type=jnp.float32)
    o_ref[...] = (out + b2_ref[...]).astype(o_ref.dtype)


def prepare_params(w1, b1, w2, b2):
    """One-time parameter prep (call once, outside the hot forward path).

    Weights -> bf16 MXU operands, biases -> (1, N) f32 rows.  Keeping this out
    of the jitted forward avoids per-call cast/reshape XLA ops.
    """
    assert w1.shape == (HIDDEN_DIM2, HIDDEN_DIM3)
    assert b1.shape == (HIDDEN_DIM3,)
    assert w2.shape == (HIDDEN_DIM3, OUTPUT_DIM)
    assert b2.shape == (OUTPUT_DIM,)
    return (jnp.asarray(w1, jnp.bfloat16),
            jnp.asarray(b1, jnp.float32).reshape(1, HIDDEN_DIM3),
            jnp.asarray(w2, jnp.bfloat16),
            jnp.asarray(b2, jnp.float32).reshape(1, OUTPUT_DIM))


@functools.partial(jax.jit, static_argnames=("batch_tile",))
def adap_decoder_forward(x, w1, b1, w2, b2, *, batch_tile: int | None = None):
    """x: (B, 150) f32/bf16 -> (B, 300) f32.

    Weights as produced by prepare_params: w1 (150,200) bf16, b1 (1,200) f32,
    w2 (200,300) bf16, b2 (1,300) f32.  (PyTorch stores Linear weights as
    (out, in); this is the transposed, mathematically identical x @ W layout.)
    """
    B, F_in = x.shape
    assert F_in == HIDDEN_DIM2
    assert w1.shape == (HIDDEN_DIM2, HIDDEN_DIM3)
    assert b1.shape == (1, HIDDEN_DIM3)
    assert w2.shape == (HIDDEN_DIM3, OUTPUT_DIM)
    assert b2.shape == (OUTPUT_DIM,) or b2.shape == (1, OUTPUT_DIM)

    if batch_tile is None:
        if B <= 2048:
            # Small batch: a single grid step (fixed per-step overhead would
            # otherwise dominate).
            batch_tile = _round_up(B, 8)
        else:
            # Large batch: tiles up to 2048 rows, but at least 4 grid steps so
            # v7x's two TensorCores each get >= 2 steps and DMA overlaps MXU.
            batch_tile = min(2048, _round_up(-(-B // 4), 8))
    batch_tile = max(8, _round_up(batch_tile, 8))

    # Ragged last block is handled by Pallas's automatic write masking; the
    # unwritten garbage rows never reach HBM.
    grid = (pl.cdiv(B, batch_tile),)

    # Scoped-VMEM budget from the actual block sizes (double-buffered x / out
    # blocks, resident weights, the f32 hidden intermediate) + headroom.
    # Stays well under v7x's 64 MiB physical VMEM.
    x_blk = batch_tile * HIDDEN_DIM2 * x.dtype.itemsize
    o_blk = batch_tile * OUTPUT_DIM * 4
    h_blk = batch_tile * HIDDEN_DIM3 * 4
    w_bytes = (w1.size * w1.dtype.itemsize + w2.size * w2.dtype.itemsize
               + (b1.size + b2.size) * 4)
    vmem_limit = int(min(100 * 1024 * 1024,
                         2 * (x_blk + o_blk) + 2 * w_bytes + h_blk
                         + 8 * 1024 * 1024))

    # Memory-bound hint for XLA's scheduler around the custom call.
    cost = pl.CostEstimate(
        flops=2 * B * (HIDDEN_DIM2 * HIDDEN_DIM3 + HIDDEN_DIM3 * OUTPUT_DIM),
        transcendentals=0,
        bytes_accessed=(B * (HIDDEN_DIM2 * x.dtype.itemsize + OUTPUT_DIM * 4)
                        + w_bytes),
    )

    return pl.pallas_call(
        _mlp_kernel,
        out_shape=jax.ShapeDtypeStruct((B, OUTPUT_DIM), jnp.float32),
        grid_spec=pltpu.PrefetchScalarGridSpec(
            num_scalar_prefetch=0,
            grid=grid,
            in_specs=[
                # x tiles stream over the batch grid axis.
                pl.BlockSpec((batch_tile, HIDDEN_DIM2), lambda i: (i, 0)),
                # Weights / biases: constant index maps -> VMEM-resident,
                # loaded once (~0.2 MiB total in bf16).
                pl.BlockSpec((HIDDEN_DIM2, HIDDEN_DIM3), lambda i: (0, 0)),
                pl.BlockSpec((1, HIDDEN_DIM3), lambda i: (0, 0)),
                pl.BlockSpec((HIDDEN_DIM3, OUTPUT_DIM), lambda i: (0, 0)),
                pl.BlockSpec((1, OUTPUT_DIM), lambda i: (0, 0)),
            ],
            out_specs=pl.BlockSpec((batch_tile, OUTPUT_DIM), lambda i: (i, 0)),
        ),
        compiler_params=pltpu.CompilerParams(
            dimension_semantics=("parallel",),
            vmem_limit_bytes=vmem_limit,
        ),
        cost_estimate=cost,
    )(x, w1, b1, w2, b2)


def init_params(key):
    """Deterministic synthetic init matching nn.Linear shapes (stored (in, out))."""
    k1, k2, k3, k4 = jax.random.split(key, 4)
    bound1 = 1.0 / jnp.sqrt(HIDDEN_DIM2)
    bound2 = 1.0 / jnp.sqrt(HIDDEN_DIM3)
    w1 = jax.random.uniform(k1, (HIDDEN_DIM2, HIDDEN_DIM3), jnp.float32,
                            -bound1, bound1)
    b1 = jax.random.uniform(k2, (HIDDEN_DIM3,), jnp.float32, -bound1, bound1)
    w2 = jax.random.uniform(k3, (HIDDEN_DIM3, OUTPUT_DIM), jnp.float32,
                            -bound2, bound2)
    b2 = jax.random.uniform(k4, (OUTPUT_DIM,), jnp.float32, -bound2, bound2)
    return w1, b1, w2, b2


if __name__ == "__main__":
    key = jax.random.PRNGKey(0)
    k_x, k_p = jax.random.split(key)

    w1, b1, w2, b2 = init_params(k_p)
    w1_p, b1_p, w2_p, b2_p = prepare_params(w1, b1, w2, b2)

    def reference(xx):
        # Plain-JAX f32 reference (same math as the PyTorch forward).
        return jnp.maximum(xx @ w1 + b1, 0.0) @ w2 + b2

    # Small aligned batch.
    batch = 8
    x = jax.random.normal(k_x, (batch, HIDDEN_DIM2), dtype=jnp.float32)
    out = jax.block_until_ready(adap_decoder_forward(x, w1_p, b1_p, w2_p, b2_p))
    assert out.shape == (batch, OUTPUT_DIM) and out.dtype == jnp.float32
    ref = reference(x)
    # Tolerance loosened for bf16 matmul operands (f32 accumulation).
    assert jnp.allclose(out, ref, atol=5e-2, rtol=5e-2), (
        float(jnp.max(jnp.abs(out - ref))))

    # Ragged batch (exercises Pallas masking of the partial last block).
    batch2 = 10
    x2 = jax.random.normal(k_x, (batch2, HIDDEN_DIM2), dtype=jnp.float32)
    out2 = jax.block_until_ready(adap_decoder_forward(x2, w1_p, b1_p, w2_p, b2_p))
    assert out2.shape == (batch2, OUTPUT_DIM)
    ref2 = reference(x2)
    assert jnp.allclose(out2, ref2, atol=5e-2, rtol=5e-2), (
        float(jnp.max(jnp.abs(out2 - ref2))))

    print("KERNEL_OK")
</pallas_src>

<mosaic_0001>
module attributes {stable_mosaic.version = 11 : i64} {
  func.func @_mlp_kernel(%arg0: i32, %arg1: memref<8x150xf32, #tpu.memory_space<vmem>>, %arg2: memref<150x200xbf16, #tpu.memory_space<vmem>>, %arg3: memref<1x200xf32, #tpu.memory_space<vmem>>, %arg4: memref<200x300xbf16, #tpu.memory_space<vmem>>, %arg5: memref<1x300xf32, #tpu.memory_space<vmem>>, %arg6: memref<8x300xf32, #tpu.memory_space<vmem>>) attributes {dimension_semantics = [#tpu.dimension_semantics<parallel>], iteration_bounds = array<i64: 1>, scalar_prefetch = 0 : i64, scratch_operands = 0 : i64, tpu.core_type = #tpu.core_type<tc>, window_params = [{transform_indices = @transform_0, window_bounds = array<i64: 8, 150>}, {pipeline_mode = #tpu.pipeline_mode<synchronous>, transform_indices = @transform_1, window_bounds = array<i64: 150, 200>}, {pipeline_mode = #tpu.pipeline_mode<synchronous>, transform_indices = @transform_2, window_bounds = array<i64: 1, 200>}, {pipeline_mode = #tpu.pipeline_mode<synchronous>, transform_indices = @transform_3, window_bounds = array<i64: 200, 300>}, {pipeline_mode = #tpu.pipeline_mode<synchronous>, transform_indices = @transform_4, window_bounds = array<i64: 1, 300>}, {transform_indices = @transform_5, window_bounds = array<i64: 8, 300>}]} {
    %c0 = arith.constant 0 : index
    %c0_0 = arith.constant 0 : index
    %0 = vector.load %arg1[%c0, %c0_0] : memref<8x150xf32, #tpu.memory_space<vmem>>, vector<8x150xf32>
    %1 = arith.truncf %0 : vector<8x150xf32> to vector<8x150xbf16>
    %c0_1 = arith.constant 0 : index
    %c0_2 = arith.constant 0 : index
    %2 = vector.load %arg2[%c0_1, %c0_2] : memref<150x200xbf16, #tpu.memory_space<vmem>>, vector<150x200xbf16>
    %cst = arith.constant dense<0.000000e+00> : vector<8x200xf32>
    %3 = tpu.matmul %1, %2, %cst {dimension_numbers = #tpu.dot_dimension_numbers<[1], [0], [0], [1], [0, 0, 1, 1], [], []>} : vector<8x150xbf16>, vector<150x200xbf16>, vector<8x200xf32> -> vector<8x200xf32>
    %c0_3 = arith.constant 0 : index
    %c0_4 = arith.constant 0 : index
    %4 = vector.load %arg3[%c0_3, %c0_4] : memref<1x200xf32, #tpu.memory_space<vmem>>, vector<1x200xf32>
    %5 = vector.broadcast %4 : vector<1x200xf32> to vector<8x200xf32>
    %6 = arith.addf %3, %5 : vector<8x200xf32>
    %cst_5 = arith.constant 0.000000e+00 : f32
    %7 = vector.broadcast %cst_5 : f32 to vector<8x200xf32>
    %8 = arith.maximumf %6, %7 : vector<8x200xf32>
    %9 = arith.truncf %8 : vector<8x200xf32> to vector<8x200xbf16>
    %c0_6 = arith.constant 0 : index
    %c0_7 = arith.constant 0 : index
    %10 = vector.load %arg4[%c0_6, %c0_7] : memref<200x300xbf16, #tpu.memory_space<vmem>>, vector<200x300xbf16>
    %cst_8 = arith.constant dense<0.000000e+00> : vector<8x300xf32>
    %11 = tpu.matmul %9, %10, %cst_8 {dimension_numbers = #tpu.dot_dimension_numbers<[1], [0], [0], [1], [0, 0, 1, 1], [], []>} : vector<8x200xbf16>, vector<200x300xbf16>, vector<8x300xf32> -> vector<8x300xf32>
    %c0_9 = arith.constant 0 : index
    %c0_10 = arith.constant 0 : index
    %12 = vector.load %arg5[%c0_9, %c0_10] : memref<1x300xf32, #tpu.memory_space<vmem>>, vector<1x300xf32>
    %13 = vector.broadcast %12 : vector<1x300xf32> to vector<8x300xf32>
    %14 = arith.addf %11, %13 : vector<8x300xf32>
    %c0_11 = arith.constant 0 : index
    %c0_12 = arith.constant 0 : index
    %15 = vector.load %arg6[%c0_11, %c0_12] : memref<8x300xf32, #tpu.memory_space<vmem>>, vector<8x300xf32>
    tpu.vector_store %arg6[%c0_11, %c0_12], %14 {strides = array<i32>} : memref<8x300xf32, #tpu.memory_space<vmem>>, vector<8x300xf32>,
    return
  }
  func.func @transform_0(%arg0: i32) -> (i32, i32) {
    %c0_i32 = arith.constant 0 : i32
    %c0_i32_0 = arith.constant 0 : i32
    return %arg0, %c0_i32 : i32, i32
  }
  func.func @transform_1(%arg0: i32) -> (i32, i32) {
    %c0_i32 = arith.constant 0 : i32
    %c0_i32_0 = arith.constant 0 : i32
    %c0_i32_1 = arith.constant 0 : i32
    return %c0_i32, %c0_i32_0 : i32, i32
  }
  func.func @transform_2(%arg0: i32) -> (i32, i32) {
    %c0_i32 = arith.constant 0 : i32
    %c0_i32_0 = arith.constant 0 : i32
    %c0_i32_1 = arith.constant 0 : i32
    return %c0_i32, %c0_i32_0 : i32, i32
  }
  func.func @transform_3(%arg0: i32) -> (i32, i32) {
    %c0_i32 = arith.constant 0 : i32
    %c0_i32_0 = arith.constant 0 : i32
    %c0_i32_1 = arith.constant 0 : i32
    return %c0_i32, %c0_i32_0 : i32, i32
  }
  func.func @transform_4(%arg0: i32) -> (i32, i32) {
    %c0_i32 = arith.constant 0 : i32
    %c0_i32_0 = arith.constant 0 : i32
    %c0_i32_1 = arith.constant 0 : i32
    return %c0_i32, %c0_i32_0 : i32, i32
  }
  func.func @transform_5(%arg0: i32) -> (i32, i32) {
    %c0_i32 = arith.constant 0 : i32
    %c0_i32_0 = arith.constant 0 : i32
    return %arg0, %c0_i32 : i32, i32
  }
}

</mosaic_0001>

<llo_original>
// kernel: adap_decoder_forward.1
$region0: #{adap_decoder_forward.1}
  #allocation0 [shape = 'u32[]', space=smem, size = 0x4, offset = 0x4, fixed_abs, tag = 'smem constant byte address 0x4 - core index']
  #allocation1 [shape = 'u32[144,128]{1,0:T(1,128)}', space=vmem, size = 0x12000, scoped, tag = 'internal scratch']
  %s0 = inlined_call_operand.hbm [shape: f32[8,150], index: 0, kind: input, shape index: {}]
  %s1 = inlined_call_operand.hbm [shape: bf16[150,200], index: 1, kind: input, shape index: {}]
  %s2 = inlined_call_operand.vmem [shape: f32[1,200], index: 2, kind: input, shape index: {}]
  %s3 = inlined_call_operand.hbm [shape: bf16[200,300], index: 3, kind: input, shape index: {}]
  %s4 = inlined_call_operand.vmem [shape: f32[1,300], index: 4, kind: input, shape index: {}]
  %s5 = inlined_call_operand.hbm [shape: f32[8,300], index: 5, kind: output, shape index: {}]
  %s6 = sld [smem:[#allocation0]]
  $region42: #{adap_decoder_forward.1} parent=0
    _
  %s8 = ssub.s32 1, %s6
  %s9 = scalar_select 0, %s8, %s6
  $region1: #{adap_decoder_forward.1} parent=0
    #allocation2 [shape = 'u8[8192]{0}', space=vmem, size = 0x2000, scoped, tag = 'input window, operand 0, single buffered']
    #allocation3 [shape = 's32[1]{0}', space=sflag, size = 0x4, scoped, tag = 'scoped memory for adap_decoder_forward.1']
    #allocation4 [shape = 's32[1]{0}', space=sflag, size = 0x4, scoped, tag = 'scoped memory for adap_decoder_forward.1']
    #allocation5 [shape = 'u8[77824]{0}', space=vmem, size = 0x13000, scoped, tag = 'input window, operand 1, single buffered']
    #allocation6 [shape = 's32[1]{0}', space=sflag, size = 0x4, scoped, tag = 'scoped memory for adap_decoder_forward.1']
    #allocation7 [shape = 'u8[153600]{0}', space=vmem, size = 0x25800, scoped, tag = 'input window, operand 3, single buffered']
    #allocation8 [shape = 'u8[12288]{0}', space=vmem, size = 0x3000, scoped, tag = 'output window, operand 0, single buffered']
    %10 = vsyncpa [#allocation3], 0
    %11 = vsyncpa [#allocation6], 0
    %12 = vsyncpa [#allocation4], 0
    // Predicated region
    $region2: #{adap_decoder_forward.1} parent=1 // pred_check
      _
    $region3: #{adap_decoder_forward.1} parent=1 // pred_check_branch
      %14 = sbr.rel (0) target = $region5
    $region4: #{adap_decoder_forward.1} parent=1 // pred_region
      %s16 = ssub.s32 256, 256
      %17 = vsyncadd [#allocation3], %s16
      %s19 = sshll.u32 [#allocation2], 4
      %s20 = int_to_ptr.vmem [resolvable:$true] %s19
      %22 = dma.hbm_to_vmem [thread:$0]  %s0, 256, %s20, [#allocation3]
    $region5: #{adap_decoder_forward.1} parent=1 // pred_fallthru
      _
    // Predicated region
    $region6: #{adap_decoder_forward.1} parent=1 // pred_check
      _
    $region7: #{adap_decoder_forward.1} parent=1 // pred_check_branch
      %24 = sbr.rel (0) target = $region9
    $region8: #{adap_decoder_forward.1} parent=1 // pred_region
      %s26 = ssub.s32 2432, 2432
      %27 = vsyncadd [#allocation6], %s26
      %s28 = sshll.u32 [#allocation5], 4
      %s29 = int_to_ptr.vmem [resolvable:$true] %s28
      %34 = dma.hbm_to_vmem [thread:$0]  %s1, 2432, %s29, [#allocation6], 128, 128, 8
    $region9: #{adap_decoder_forward.1} parent=1 // pred_fallthru
      _
    // Predicated region
    $region10: #{adap_decoder_forward.1} parent=1 // pred_check
      _
    $region11: #{adap_decoder_forward.1} parent=1 // pred_check_branch
      %36 = sbr.rel (0) target = $region13
    $region12: #{adap_decoder_forward.1} parent=1 // pred_region
      _
    $region13: #{adap_decoder_forward.1} parent=1 // pred_fallthru
      _
    // Predicated region
    $region14: #{adap_decoder_forward.1} parent=1 // pred_check
      _
    $region15: #{adap_decoder_forward.1} parent=1 // pred_check_branch
      %38 = sbr.rel (0) target = $region17
    $region16: #{adap_decoder_forward.1} parent=1 // pred_region
      %s40 = ssub.s32 4800, 4800
      %41 = vsyncadd [#allocation6], %s40
      %s42 = sshll.u32 [#allocation7], 4
      %s43 = int_to_ptr.vmem [resolvable:$true] %s42
      %48 = dma.hbm_to_vmem [thread:$0]  %s3, 4800, %s43, [#allocation6], 192, 192, 12
    $region17: #{adap_decoder_forward.1} parent=1 // pred_fallthru
      _
    // Predicated region
    $region18: #{adap_decoder_forward.1} parent=1 // pred_check
      _
    $region19: #{adap_decoder_forward.1} parent=1 // pred_check_branch
      %50 = sbr.rel (0) target = $region21
    $region20: #{adap_decoder_forward.1} parent=1 // pred_region
      _
    $region21: #{adap_decoder_forward.1} parent=1 // pred_fallthru
      _
    // Predicated region
    $region22: #{adap_decoder_forward.1} parent=1 // pred_check
      _
    $region23: #{adap_decoder_forward.1} parent=1 // pred_check_branch
      %52 = sbr.rel (0) target = $region25
    $region24: #{adap_decoder_forward.1} parent=1 // pred_region
      %53 = dma.done [#allocation3], 256
    $region25: #{adap_decoder_forward.1} parent=1 // pred_fallthru
      _
    // Predicated region
    $region26: #{adap_decoder_forward.1} parent=1 // pred_check
      _
    $region27: #{adap_decoder_forward.1} parent=1 // pred_check_branch
      %55 = sbr.rel (0) target = $region29
    $region28: #{adap_decoder_forward.1} parent=1 // pred_region
      %56 = dma.done [#allocation6], 2432
    $region29: #{adap_decoder_forward.1} parent=1 // pred_fallthru
      _
    // Predicated region
    $region30: #{adap_decoder_forward.1} parent=1 // pred_check
      _
    $region31: #{adap_decoder_forward.1} parent=1 // pred_check_branch
      %58 = sbr.rel (0) target = $region33
    $region32: #{adap_decoder_forward.1} parent=1 // pred_region
      %59 = dma.done [#allocation6], 4800
    $region33: #{adap_decoder_forward.1} parent=1 // pred_fallthru
      _
    %v61 = vld [vmem:[#allocation2] sm:$0xff]
    %v62 = vld [vmem:[#allocation2 + $0x8] sm:$0xff]
    %v63 = vpack.c.bf16 %v61, %v61
    %v64 = vpack.c.bf16 %v62, %v62
    %v65 = vld [vmem:[#allocation5] sm:$0xff]
    %v66 = vld [vmem:[#allocation5 + $0x8] sm:$0xff]
    %v67 = vld [vmem:[#allocation5 + $0x10] sm:$0xff]
    %v68 = vld [vmem:[#allocation5 + $0x18] sm:$0xff]
    %v69 = vld [vmem:[#allocation5 + $0x20] sm:$0xff]
    %v70 = vld [vmem:[#allocation5 + $0x28] sm:$0xff]
    %v71 = vld [vmem:[#allocation5 + $0x30] sm:$0xff]
    %v72 = vld [vmem:[#allocation5 + $0x38] sm:$0xff]
    %v73 = vld [vmem:[#allocation5 + $0x40] sm:$0xff]
    %v74 = vld [vmem:[#allocation5 + $0x48] sm:$0xff]
    %v75 = vld [vmem:[#allocation5 + $0x50] sm:$0xff]
    %v76 = vld [vmem:[#allocation5 + $0x58] sm:$0xff]
    %v77 = vld [vmem:[#allocation5 + $0x60] sm:$0xff]
    %v78 = vld [vmem:[#allocation5 + $0x68] sm:$0xff]
    %v79 = vld [vmem:[#allocation5 + $0x70] sm:$0xff]
    %v80 = vld [vmem:[#allocation5 + $0x78] sm:$0xff]
    %v81 = vld [vmem:[#allocation5 + $0x80] sm:$0xff]
    %v82 = vld [vmem:[#allocation5 + $0x88] sm:$0xff]
    %v83 = vld [vmem:[#allocation5 + $0x90] sm:$0x77]
    %v84 = vld [vmem:[%s2] sm:$0x3]
    %v86 = vlaneseq
    %v87 = vshrl.u32 %v86, 7
    %v88 = vsub.s32 0, %v87
    %v89 = vrot.slane %v84, %v88
    %v90 = vlaneseq
    %v91 = vshrl.u32 %v90, 7
    %v92 = vsub.s32 1, %v91
    %v93 = vrot.slane %v84, %v92
    %v115 = vunpack.c.l.b16 %v65
    %v116 = vunpack.c.h.b16 %v65
    %v117 = vunpack.c.l.b16 %v66
    %v118 = vunpack.c.h.b16 %v66
    %v119 = vunpack.c.l.b16 %v67
    %v120 = vunpack.c.h.b16 %v67
    %v121 = vunpack.c.l.b16 %v68
    %v122 = vunpack.c.h.b16 %v68
    %v123 = vunpack.c.l.b16 %v69
    %v124 = vunpack.c.h.b16 %v69
    %v125 = vunpack.c.l.b16 %v70
    %v126 = vunpack.c.h.b16 %v70
    %v127 = vunpack.c.l.b16 %v71
    %v128 = vunpack.c.h.b16 %v71
    %v129 = vunpack.c.l.b16 %v72
    %v130 = vunpack.c.h.b16 %v72
    %v131 = vunpack.c.l.b16 %v73
    %v132 = vunpack.c.h.b16 %v73
    %v133 = vunpack.c.l.b16 %v74
    %v134 = vunpack.c.h.b16 %v74
    %v135 = vunpack.c.l.b16 %v75
    %v136 = vunpack.c.h.b16 %v75
    %v137 = vunpack.c.l.b16 %v76
    %v138 = vunpack.c.h.b16 %v76
    %v139 = vunpack.c.l.b16 %v77
    %v140 = vunpack.c.h.b16 %v77
    %v141 = vunpack.c.l.b16 %v78
    %v142 = vunpack.c.h.b16 %v78
    %v143 = vunpack.c.l.b16 %v79
    %v144 = vunpack.c.h.b16 %v79
    %v145 = vunpack.c.l.b16 %v80
    %v146 = vunpack.c.h.b16 %v80
    %v147 = vunpack.c.l.b16 %v81
    %v148 = vunpack.c.h.b16 %v81
    %v149 = vunpack.c.l.b16 %v82
    %v150 = vunpack.c.h.b16 %v82
    %v151 = vunpack.c.l.b16 %v83
    %v152 = vunpack.c.h.b16 %v83
    %v153 = vpack.c.b16 %v117, %v115
    %v154 = vpack.c.b16 %v118, %v116
    %v155 = vpack.c.b16 %v121, %v119
    %v156 = vpack.c.b16 %v122, %v120
    %v157 = vpack.c.b16 %v125, %v123
    %v158 = vpack.c.b16 %v126, %v124
    %v159 = vpack.c.b16 %v129, %v127
    %v160 = vpack.c.b16 %v130, %v128
    %v161 = vpack.c.b16 %v133, %v131
    %v162 = vpack.c.b16 %v134, %v132
    %v163 = vpack.c.b16 %v137, %v135
    %v164 = vpack.c.b16 %v138, %v136
    %v165 = vpack.c.b16 %v141, %v139
    %v166 = vpack.c.b16 %v142, %v140
    %v167 = vpack.c.b16 %v145, %v143
    %v168 = vpack.c.b16 %v146, %v144
    %v169 = vpack.c.b16 %v149, %v147
    %v170 = vpack.c.b16 %v150, %v148
    %v171 = vpack.c.b16 %v151, %v151
    %v172 = vpack.c.b16 %v152, %v152
    %vm191 = vcmask 179200
    %v193 = vsel %vm191, %v64, 0
    %vm195 = vcmask 1042432
    %v197 = vsel %vm195, %v171, 0
    %v200 = vsel %vm195, %v172, 0
    %202 = vmatprep.subr.bf16.mxu0 %v154
    %203 = vmatpush1.bf16.msra.mxu0 %v153
    %204 = vmatprep.subr.bf16.mxu0 %v156
    %205 = vmatpush1.bf16.msra.mxu0 %v155
    %206 = vmatprep.subr.bf16.mxu0 %v158
    %207 = vmatpush1.bf16.msra.mxu0 %v157
    %208 = vmatprep.subr.bf16.mxu0 %v160
    %209 = vmatpush1.bf16.msra.mxu0 %v159
    %210 = vmatprep.subr.bf16.mxu0 %v162
    %211 = vmatpush1.bf16.msra.mxu0 %v161
    %212 = vmatprep.subr.bf16.mxu0 %v164
    %213 = vmatpush1.bf16.msra.mxu0 %v163
    %214 = vmatprep.subr.bf16.mxu0 %v166
    %215 = vmatpush1.bf16.msra.mxu0 %v165
    %216 = vmatprep.subr.bf16.mxu0 %v168
    %217 = vmatpush1.bf16.msra.mxu0 %v167
    %218 = vmatprep.subr.bf16.mxu0 %v170
    %219 = vmatpush1.bf16.msra.mxu0 %v169
    %220 = vmatprep.subr.bf16.mxu0 %v200
    %221 = vmatpush1.bf16.msra.mxu0 %v197
    %222 = vmatprep.subr.bf16.mxu0 0
    %223 = vmatpush1.bf16.msra.mxu0 0
    %224 = vmatprep.subr.bf16.mxu0 0
    %225 = vmatpush1.bf16.msra.mxu0 0
    %226 = vmatprep.subr.bf16.mxu0 0
    %227 = vmatpush1.bf16.msra.mxu0 0
    %228 = vmatprep.subr.bf16.mxu0 0
    %229 = vmatpush1.bf16.msra.mxu0 0
    %230 = vmatprep.subr.bf16.mxu0 0
    %231 = vmatpush1.bf16.msra.mxu0 0
    %232 = vmatprep.subr.bf16.mxu0 0
    %233 = vmatpush1.bf16.msra.mxu0 0
    %234 = vmatprep.mubr.bf16.mxu0 %v193
    %235 = vmatmul.mubr.bf16.gmra.mrb[0].mxu0 %v63
    %v236 = vpop.f32.mrb[0].mxu0
    %v237 = vadd.f32 %v89, %v236
    %v238 = vpop.f32.mrb[0].mxu0
    %v239 = vadd.f32 %v93, %v238
    %v240 = vpop.f32.mrb[0].mxu0
    %v241 = vpop.f32.mrb[0].mxu0
    %242 = vdwg.mxu0
    %v243 = vmax.f32 %v237, 0.0
    %v244 = vmax.f32 %v239, 0.0
    %v245 = vpack.c.bf16 %v243, %v243
    %v246 = vpack.c.bf16 %v244, %v244
    %v247 = vld [vmem:[#allocation7] sm:$0xff]
    %v248 = vld [vmem:[#allocation7 + $0x8] sm:$0xf]
    %v249 = vld [vmem:[#allocation7 + $0xc] sm:$0xff]
    %v250 = vld [vmem:[#allocation7 + $0x14] sm:$0xf]
    %v251 = vld [vmem:[#allocation7 + $0x18] sm:$0xff]
    %v252 = vld [vmem:[#allocation7 + $0x20] sm:$0xf]
    %v253 = vld [vmem:[#allocation7 + $0x24] sm:$0xff]
    %v254 = vld [vmem:[#allocation7 + $0x2c] sm:$0xf]
    %v255 = vld [vmem:[#allocation7 + $0x30] sm:$0xff]
    %v256 = vld [vmem:[#allocation7 + $0x38] sm:$0xf]
    %v257 = vld [vmem:[#allocation7 + $0x3c] sm:$0xff]
    %v258 = vld [vmem:[#allocation7 + $0x44] sm:$0xf]
    %v259 = vld [vmem:[#allocation7 + $0x48] sm:$0xff]
    %v260 = vld [vmem:[#allocation7 + $0x50] sm:$0xf]
    %v261 = vld [vmem:[#allocation7 + $0x54] sm:$0xff]
    %v262 = vld [vmem:[#allocation7 + $0x5c] sm:$0xf]
    %v263 = vld [vmem:[#allocation7 + $0x60] sm:$0xff]
    %v264 = vld [vmem:[#allocation7 + $0x68] sm:$0xf]
    %v265 = vld [vmem:[#allocation7 + $0x6c] sm:$0xff]
    %v266 = vld [vmem:[#allocation7 + $0x74] sm:$0xf]
    %v267 = vld [vmem:[#allocation7 + $0x78] sm:$0xff]
    %v268 = vld [vmem:[#allocation7 + $0x80] sm:$0xf]
    %v269 = vld [vmem:[#allocation7 + $0x84] sm:$0xff]
    %v270 = vld [vmem:[#allocation7 + $0x8c] sm:$0xf]
    %v271 = vld [vmem:[#allocation7 + $0x90] sm:$0xff]
    %v272 = vld [vmem:[#allocation7 + $0x98] sm:$0xf]
    %v273 = vld [vmem:[#allocation7 + $0x9c] sm:$0xff]
    %v274 = vld [vmem:[#allocation7 + $0xa4] sm:$0xf]
    %v275 = vld [vmem:[#allocation7 + $0xa8] sm:$0xff]
    %v276 = vld [vmem:[#allocation7 + $0xb0] sm:$0xf]
    %v277 = vld [vmem:[#allocation7 + $0xb4] sm:$0xff]
    %v278 = vld [vmem:[#allocation7 + $0xbc] sm:$0xf]
    %v279 = vld [vmem:[#allocation7 + $0xc0] sm:$0xff]
    %v280 = vld [vmem:[#allocation7 + $0xc8] sm:$0xf]
    %v281 = vld [vmem:[#allocation7 + $0xcc] sm:$0xff]
    %v282 = vld [vmem:[#allocation7 + $0xd4] sm:$0xf]
    %v283 = vld [vmem:[#allocation7 + $0xd8] sm:$0xff]
    %v284 = vld [vmem:[#allocation7 + $0xe0] sm:$0xf]
    %v285 = vld [vmem:[#allocation7 + $0xe4] sm:$0xff]
    %v286 = vld [vmem:[#allocation7 + $0xec] sm:$0xf]
    %v287 = vld [vmem:[#allocation7 + $0xf0] sm:$0xff]
    %v288 = vld [vmem:[#allocation7 + $0xf8] sm:$0xf]
    %v289 = vld [vmem:[#allocation7 + $0xfc] sm:$0xff]
    %v290 = vld [vmem:[#allocation7 + $0x104] sm:$0xf]
    %v291 = vld [vmem:[#allocation7 + $0x108] sm:$0xff]
    %v292 = vld [vmem:[#allocation7 + $0x110] sm:$0xf]
    %v293 = vld [vmem:[#allocation7 + $0x114] sm:$0xff]
    %v294 = vld [vmem:[#allocation7 + $0x11c] sm:$0xf]
    %v295 = vld [vmem:[#allocation7 + $0x120] sm:$0xff]
    %v296 = vld [vmem:[#allocation7 + $0x128] sm:$0xf]
    %v297 = vld [vmem:[%s4] sm:$0x7]
    %v299 = vlaneseq
    %v300 = vshrl.u32 %v299, 7
    %v301 = vsub.s32 0, %v300
    %v302 = vrot.slane %v297, %v301
    %v303 = vlaneseq
    %v304 = vshrl.u32 %v303, 7
    %v305 = vsub.s32 1, %v304
    %v306 = vrot.slane %v297, %v305
    %v307 = vlaneseq
    %v308 = vshrl.u32 %v307, 7
    %v309 = vsub.s32 2, %v308
    %v310 = vrot.slane %v297, %v309
    %v364 = vunpack.c.l.b16 %v247
    %v365 = vunpack.c.h.b16 %v247
    %v366 = vunpack.c.l.b16 %v248
    %v367 = vunpack.c.l.b16 %v249
    %v368 = vunpack.c.h.b16 %v249
    %v369 = vunpack.c.l.b16 %v250
    %v370 = vunpack.c.l.b16 %v251
    %v371 = vunpack.c.h.b16 %v251
    %v372 = vunpack.c.l.b16 %v252
    %v373 = vunpack.c.l.b16 %v253
    %v374 = vunpack.c.h.b16 %v253
    %v375 = vunpack.c.l.b16 %v254
    %v376 = vunpack.c.l.b16 %v255
    %v377 = vunpack.c.h.b16 %v255
    %v378 = vunpack.c.l.b16 %v256
    %v379 = vunpack.c.l.b16 %v257
    %v380 = vunpack.c.h.b16 %v257
    %v381 = vunpack.c.l.b16 %v258
    %v382 = vunpack.c.l.b16 %v259
    %v383 = vunpack.c.h.b16 %v259
    %v384 = vunpack.c.l.b16 %v260
    %v385 = vunpack.c.l.b16 %v261
    %v386 = vunpack.c.h.b16 %v261
    %v387 = vunpack.c.l.b16 %v262
    %v388 = vunpack.c.l.b16 %v263
    %v389 = vunpack.c.h.b16 %v263
    %v390 = vunpack.c.l.b16 %v264
    %v391 = vunpack.c.l.b16 %v265
    %v392 = vunpack.c.h.b16 %v265
    %v393 = vunpack.c.l.b16 %v266
    %v394 = vunpack.c.l.b16 %v267
    %v395 = vunpack.c.h.b16 %v267
    %v396 = vunpack.c.l.b16 %v268
    %v397 = vunpack.c.l.b16 %v269
    %v398 = vunpack.c.h.b16 %v269
    %v399 = vunpack.c.l.b16 %v270
    %v400 = vunpack.c.l.b16 %v271
    %v401 = vunpack.c.h.b16 %v271
    %v402 = vunpack.c.l.b16 %v272
    %v403 = vunpack.c.l.b16 %v273
    %v404 = vunpack.c.h.b16 %v273
    %v405 = vunpack.c.l.b16 %v274
    %v406 = vunpack.c.l.b16 %v275
    %v407 = vunpack.c.h.b16 %v275
    %v408 = vunpack.c.l.b16 %v276
    %v409 = vunpack.c.l.b16 %v277
    %v410 = vunpack.c.h.b16 %v277
    %v411 = vunpack.c.l.b16 %v278
    %v412 = vunpack.c.l.b16 %v279
    %v413 = vunpack.c.h.b16 %v279
    %v414 = vunpack.c.l.b16 %v280
    %v415 = vunpack.c.l.b16 %v281
    %v416 = vunpack.c.h.b16 %v281
    %v417 = vunpack.c.l.b16 %v282
    %v418 = vunpack.c.l.b16 %v283
    %v419 = vunpack.c.h.b16 %v283
    %v420 = vunpack.c.l.b16 %v284
    %v421 = vunpack.c.l.b16 %v285
    %v422 = vunpack.c.h.b16 %v285
    %v423 = vunpack.c.l.b16 %v286
    %v424 = vunpack.c.l.b16 %v287
    %v425 = vunpack.c.h.b16 %v287
    %v426 = vunpack.c.l.b16 %v288
    %v427 = vunpack.c.l.b16 %v289
    %v428 = vunpack.c.h.b16 %v289
    %v429 = vunpack.c.l.b16 %v290
    %v430 = vunpack.c.l.b16 %v291
    %v431 = vunpack.c.h.b16 %v291
    %v432 = vunpack.c.l.b16 %v292
    %v433 = vunpack.c.l.b16 %v293
    %v434 = vunpack.c.h.b16 %v293
    %v435 = vunpack.c.l.b16 %v294
    %v436 = vunpack.c.l.b16 %v295
    %v437 = vunpack.c.h.b16 %v295
    %v438 = vunpack.c.l.b16 %v296
    %v439 = vpack.c.b16 %v367, %v364
    %v440 = vpack.c.b16 %v368, %v365
    %v441 = vpack.c.b16 %v369, %v366
    %v442 = vpack.c.b16 %v373, %v370
    %v443 = vpack.c.b16 %v374, %v371
    %v444 = vpack.c.b16 %v375, %v372
    %v445 = vpack.c.b16 %v379, %v376
    %v446 = vpack.c.b16 %v380, %v377
    %v447 = vpack.c.b16 %v381, %v378
    %v448 = vpack.c.b16 %v385, %v382
    %v449 = vpack.c.b16 %v386, %v383
    %v450 = vpack.c.b16 %v387, %v384
    %v451 = vpack.c.b16 %v391, %v388
    %v452 = vpack.c.b16 %v392, %v389
    %v453 = vpack.c.b16 %v393, %v390
    %v454 = vpack.c.b16 %v397, %v394
    %v455 = vpack.c.b16 %v398, %v395
    %v456 = vpack.c.b16 %v399, %v396
    %v457 = vpack.c.b16 %v403, %v400
    %v458 = vpack.c.b16 %v404, %v401
    %v459 = vpack.c.b16 %v405, %v402
    %v460 = vpack.c.b16 %v409, %v406
    %v461 = vpack.c.b16 %v410, %v407
    %v462 = vpack.c.b16 %v411, %v408
    %v463 = vpack.c.b16 %v415, %v412
    %v464 = vpack.c.b16 %v416, %v413
    %v465 = vpack.c.b16 %v417, %v414
    %v466 = vpack.c.b16 %v421, %v418
    %v467 = vpack.c.b16 %v422, %v419
    %v468 = vpack.c.b16 %v423, %v420
    %v469 = vpack.c.b16 %v427, %v424
    %v470 = vpack.c.b16 %v428, %v425
    %v471 = vpack.c.b16 %v429, %v426
    %v472 = vpack.c.b16 %v433, %v430
    %v473 = vpack.c.b16 %v434, %v431
    %v474 = vpack.c.b16 %v435, %v432
    %v475 = vpack.c.b16 %v436, %v436
    %v476 = vpack.c.b16 %v437, %v437
    %v477 = vpack.c.b16 %v438, %v438
    %vm514 = vcmask 588800
    %v516 = vsel %vm514, %v246, 0
    %vm518 = vcmask 1043456
    %v520 = vsel %vm518, %v475, 0
    %v523 = vsel %vm518, %v476, 0
    %v526 = vsel %vm518, %v477, 0
    %528 = vmatprep.subr.bf16.mxu0 %v440
    %529 = vmatpush1.bf16.msra.mxu0 %v439
    %530 = vmatprep.subr.bf16.mxu0 %v443
    %531 = vmatpush1.bf16.msra.mxu0 %v442
    %532 = vmatprep.subr.bf16.mxu0 %v446
    %533 = vmatpush1.bf16.msra.mxu0 %v445
    %534 = vmatprep.subr.bf16.mxu0 %v449
    %535 = vmatpush1.bf16.msra.mxu0 %v448
    %536 = vmatprep.subr.bf16.mxu0 %v452
    %537 = vmatpush1.bf16.msra.mxu0 %v451
    %538 = vmatprep.subr.bf16.mxu0 %v455
    %539 = vmatpush1.bf16.msra.mxu0 %v454
    %540 = vmatprep.subr.bf16.mxu0 %v458
    %541 = vmatpush1.bf16.msra.mxu0 %v457
    %542 = vmatprep.subr.bf16.mxu0 %v461
    %543 = vmatpush1.bf16.msra.mxu0 %v460
    %544 = vmatprep.subr.bf16.mxu0 %v464
    %545 = vmatpush1.bf16.msra.mxu0 %v463
    %546 = vmatprep.subr.bf16.mxu0 %v467
    %547 = vmatpush1.bf16.msra.mxu0 %v466
    %548 = vmatprep.subr.bf16.mxu0 %v470
    %549 = vmatpush1.bf16.msra.mxu0 %v469
    %550 = vmatprep.subr.bf16.mxu0 %v473
    %551 = vmatpush1.bf16.msra.mxu0 %v472
    %552 = vmatprep.subr.bf16.mxu0 %v523
    %553 = vmatpush1.bf16.msra.mxu0 %v520
    %554 = vmatprep.subr.bf16.mxu0 0
    %555 = vmatpush1.bf16.msra.mxu0 0
    %556 = vmatprep.subr.bf16.mxu0 0
    %557 = vmatpush1.bf16.msra.mxu0 0
    %558 = vmatprep.subr.bf16.mxu0 0
    %559 = vmatpush1.bf16.msra.mxu0 0
    %560 = vmatprep.mubr.bf16.mxu0 %v516
    %561 = vmatmul.mubr.bf16.gmra.mrb[0].mxu0 %v245
    %v562 = vpop.f32.mrb[0].mxu0
    %v563 = vadd.f32 %v302, %v562
    %v564 = vpop.f32.mrb[0].mxu0
    %v565 = vadd.f32 %v306, %v564
    %v566 = vpop.f32.mrb[0].mxu0
    %v567 = vpop.f32.mrb[0].mxu0
    %568 = vdwg.mxu0
    %569 = vmatprep.subr.bf16.mxu0 0
    %570 = vmatpush1.bf16.msra.mxu0 %v441
    %571 = vmatprep.subr.bf16.mxu0 0
    %572 = vmatpush1.bf16.msra.mxu0 %v444
    %573 = vmatprep.subr.bf16.mxu0 0
    %574 = vmatpush1.bf16.msra.mxu0 %v447
    %575 = vmatprep.subr.bf16.mxu0 0
    %576 = vmatpush1.bf16.msra.mxu0 %v450
    %577 = vmatprep.subr.bf16.mxu0 0
    %578 = vmatpush1.bf16.msra.mxu0 %v453
    %579 = vmatprep.subr.bf16.mxu0 0
    %580 = vmatpush1.bf16.msra.mxu0 %v456
    %581 = vmatprep.subr.bf16.mxu0 0
    %582 = vmatpush1.bf16.msra.mxu0 %v459
    %583 = vmatprep.subr.bf16.mxu0 0
    %584 = vmatpush1.bf16.msra.mxu0 %v462
    %585 = vmatprep.subr.bf16.mxu0 0
    %586 = vmatpush1.bf16.msra.mxu0 %v465
    %587 = vmatprep.subr.bf16.mxu0 0
    %588 = vmatpush1.bf16.msra.mxu0 %v468
    %589 = vmatprep.subr.bf16.mxu0 0
    %590 = vmatpush1.bf16.msra.mxu0 %v471
    %591 = vmatprep.subr.bf16.mxu0 0
    %592 = vmatpush1.bf16.msra.mxu0 %v474
    %593 = vmatprep.subr.bf16.mxu0 0
    %594 = vmatpush1.bf16.msra.mxu0 %v526
    %595 = vmatprep.subr.bf16.mxu0 0
    %596 = vmatpush1.bf16.msra.mxu0 0
    %597 = vmatprep.subr.bf16.mxu0 0
    %598 = vmatpush1.bf16.msra.mxu0 0
    %599 = vmatprep.subr.bf16.mxu0 0
    %600 = vmatpush1.bf16.msra.mxu0 0
    %601 = vmatprep.mubr.bf16.mxu0 %v516
    %602 = vmatmul.mubr.bf16.gmra.mrb[0].mxu0 %v245
    %v603 = vpop.f32.mrb[0].mxu0
    %v604 = vadd.f32 %v310, %v603
    %v605 = vpop.f32.mrb[0].mxu0
    %v606 = vpop.f32.mrb[0].mxu0
    %v607 = vpop.f32.mrb[0].mxu0
    %608 = vdwg.mxu0
    %609 = vst [vmem:[#allocation8] sm:$0xff] %v563
    %610 = vst [vmem:[#allocation8 + $0x8] sm:$0xff] %v565
    %vm611 = vcmask 359424
    %612 = vst.msk [vmem:[#allocation8 + $0x10] sm:$0xff] %vm611, %v604
    // Predicated region
    $region34: #{adap_decoder_forward.1} parent=1 // pred_check
      _
    $region35: #{adap_decoder_forward.1} parent=1 // pred_check_branch
      %614 = sbr.rel (0) target = $region37
    $region36: #{adap_decoder_forward.1} parent=1 // pred_region
      %s616 = ssub.s32 384, 384
      %617 = vsyncadd [#allocation4], %s616
      %s619 = sshll.u32 [#allocation8], 4
      %s620 = int_to_ptr.vmem [resolvable:$true] %s619
      %622 = dma.vmem_to_hbm [thread:$0]  %s620, 384, %s5, [#allocation4]
    $region37: #{adap_decoder_forward.1} parent=1 // pred_fallthru
      _
    // Predicated region
    $region38: #{adap_decoder_forward.1} parent=1 // pred_check
      _
    $region39: #{adap_decoder_forward.1} parent=1 // pred_check_branch
      %624 = sbr.rel (0) target = $region41
    $region40: #{adap_decoder_forward.1} parent=1 // pred_region
      %625 = dma.done [#allocation4], 384
    $region41: #{adap_decoder_forward.1} parent=1 // pred_fallthru
      _
    %626 = vsyncpa [#allocation3], 1
    %627 = vsyncpa [#allocation6], 1
    %628 = vsyncpa [#allocation4], 1

</llo_original>
